<compile_context>
chip_gen: v7x
topology: tpu7x:2x2x1
jax: 0.10.0
libtpu: 0.0.40
codegen_flags: <defaults>
</compile_context>

<pallas_src>
import jax
import jax.numpy as jnp
from jax.experimental import pallas as pl
from jax.experimental.pallas import tpu as pltpu

_EPS = 1e-5


def _self_attn_post_kernel(
    x_ref,     # (B, C, N)   VMEM, resident across the whole grid
    att_ref,   # (TQ, N)     VMEM, streamed tile att[b, qi*TQ:(qi+1)*TQ, :]
    wh_ref,    # (C8, C)     conv_h weight (1x1 conv == channel matmul)
    ghe_ref,   # (C8, 1)     gamma * BN_h weight  (gamma folded in wrapper)
    the_ref,   # (C8, 1)     gamma * BN_h bias
    wi_ref,    # (C, C8)     conv_i weight
    gi_ref,    # (C, 1)      BN_i weight
    ti_ref,    # (C, 1)      BN_i bias
    out_ref,   # (B, C, N)   VMEM, written once in the epilogue
    h_scr,     # (B, C8, N)  f32 scratch: gamma * BN_h(conv_h(x)), channels-first
    y_scr,     # (B, C, N)   f32 scratch: conv_i(bmm(att, h)) before BN_i
):
    B, C, N = x_ref.shape
    C8 = wh_ref.shape[0]
    TQ = att_ref.shape[0]

    b = pl.program_id(0)
    qi = pl.program_id(1)
    first = jnp.logical_and(b == 0, qi == 0)
    last = jnp.logical_and(b == pl.num_programs(0) - 1,
                           qi == pl.num_programs(1) - 1)

    # ---- prologue: h = gamma * BN_h(conv_h(x)), batch-mode BN ---------------
    # Conv bias omitted: a per-channel constant before batch-mode BN is exactly
    # cancelled by the mean subtraction.  gamma is pre-folded into ghe/the.
    @pl.when(first)
    def _():
        for bb in range(B):                       # B is a tiny static constant
            h_scr[bb] = jnp.dot(wh_ref[...], x_ref[bb],
                                preferred_element_type=jnp.float32)  # (C8, N)
        h_all = h_scr[...]                                           # (B, C8, N)
        inv_cnt = 1.0 / float(B * N)
        s = jnp.sum(h_all, axis=(0, 2), keepdims=True)               # (1, C8, 1)
        ss = jnp.sum(h_all * h_all, axis=(0, 2), keepdims=True)
        mu = s * inv_cnt
        var = jnp.maximum(ss * inv_cnt - mu * mu, 0.0)               # single-pass moments
        scale = ghe_ref[...] * jax.lax.rsqrt(var + _EPS)             # (1, C8, 1)
        shift = the_ref[...] - scale * mu
        h_scr[...] = h_all * scale + shift

    # ---- streamed body: y[b, :, q-tile] = conv_i( bmm(att_tile, h[b]) ) -----
    hb = h_scr[b]                                                    # (C8, N)
    # bmm in channels-first layout: p[c, i] = sum_j h[c, j] * att[i, j]
    p = jax.lax.dot_general(hb.astype(att_ref.dtype), att_ref[...],
                            (((1,), (1,)), ((), ())),
                            preferred_element_type=jnp.float32)      # (C8, TQ)
    y_t = jnp.dot(wi_ref[...], p, preferred_element_type=jnp.float32)  # (C, TQ)
    col = qi * TQ
    if TQ % 128 == 0:
        col = pl.multiple_of(col, 128)
    y_scr[b, :, pl.ds(col, TQ)] = y_t

    # ---- epilogue: out = BN_i(y) + x, batch-mode BN --------------------------
    @pl.when(last)
    def _():
        y_all = y_scr[...]                                           # (B, C, N)
        inv_cnt = 1.0 / float(B * N)
        s = jnp.sum(y_all, axis=(0, 2), keepdims=True)               # (1, C, 1)
        ss = jnp.sum(y_all * y_all, axis=(0, 2), keepdims=True)
        mu = s * inv_cnt
        var = jnp.maximum(ss * inv_cnt - mu * mu, 0.0)
        scale = gi_ref[...] * jax.lax.rsqrt(var + _EPS)              # (1, C, 1)
        shift = ti_ref[...] - scale * mu
        out_ref[...] = (y_all * scale + shift + x_ref[...]).astype(out_ref.dtype)


def self_attention_post(x_nchw, att, params, *, tq=128, att_dtype=None):
    """x_nchw: (B, C, W, H) f32, att: (B, W*H, W*H) -> (B, C, W, H) f32.

    att_dtype=jnp.bfloat16 optionally halves the dominant HBM traffic (att is
    post-softmax in [0,1]); default keeps f32 to match PyTorch numerics.
    """
    B, C, W, H = x_nchw.shape
    N = W * H
    C8 = C // 8
    x_bcn = x_nchw.reshape(B, C, N)          # free reshape (channels-first flatten)
    if att_dtype is not None:
        att = att.astype(att_dtype)

    tq = min(tq, N)
    assert N % tq == 0, "query tile must divide W*H"
    n_qt = N // tq

    # Fold gamma into the BN_h affine once, on tiny (C8, 1) vectors.
    gamma = params["gamma"][0]
    ghe = gamma * params["bn_h_w"]
    the = gamma * params["bn_h_b"]

    grid = (B, n_qt)
    in_specs = [
        pl.BlockSpec((B, C, N), lambda b, q: (0, 0, 0)),        # x (VMEM resident)
        pl.BlockSpec((None, tq, N), lambda b, q: (b, q, 0)),    # att (streamed)
        pl.BlockSpec((C8, C), lambda b, q: (0, 0)),             # wh
        pl.BlockSpec((C8, 1), lambda b, q: (0, 0)),             # gamma * bn_h_w
        pl.BlockSpec((C8, 1), lambda b, q: (0, 0)),             # gamma * bn_h_b
        pl.BlockSpec((C, C8), lambda b, q: (0, 0)),             # wi
        pl.BlockSpec((C, 1), lambda b, q: (0, 0)),              # bn_i_w
        pl.BlockSpec((C, 1), lambda b, q: (0, 0)),              # bn_i_b
    ]
    out_spec = pl.BlockSpec((B, C, N), lambda b, q: (0, 0, 0))

    att_item = jnp.dtype(att.dtype).itemsize
    vmem_bytes = (
        2 * tq * N * att_item            # double-buffered att tile
        + 2 * B * C * N * 4              # x block
        + 2 * B * C * N * 4              # out block
        + B * C8 * N * 4                 # h scratch
        + B * C * N * 4                  # y scratch
        + 8 * (C8 * C + C * C8 + 2 * C8 + 2 * C)
    )
    vmem_limit = min(64 * 1024 * 1024, max(16 * 1024 * 1024, 2 * vmem_bytes))

    flops = B * (2 * C * C8 * N + 2 * C8 * N * N + 2 * C8 * C * N)
    bytes_accessed = (att.size * att_item
                      + 2 * x_bcn.size * 4
                      + 4 * (C8 * C + C * C8 + 2 * C8 + 2 * C))

    out = pl.pallas_call(
        _self_attn_post_kernel,
        out_shape=jax.ShapeDtypeStruct((B, C, N), x_nchw.dtype),
        grid_spec=pltpu.PrefetchScalarGridSpec(
            num_scalar_prefetch=0,
            grid=grid,
            in_specs=in_specs,
            out_specs=out_spec,
            scratch_shapes=[
                pltpu.VMEM((B, C8, N), jnp.float32),
                pltpu.VMEM((B, C, N), jnp.float32),
            ],
        ),
        compiler_params=pltpu.CompilerParams(
            dimension_semantics=("arbitrary", "arbitrary"),
            vmem_limit_bytes=int(vmem_limit),
        ),
        cost_estimate=pl.CostEstimate(flops=flops, transcendentals=0,
                                      bytes_accessed=int(bytes_accessed)),
    )(x_bcn, att, params["wh"], ghe, the, params["wi"],
      params["bn_i_w"], params["bn_i_b"])

    return out.reshape(B, C, W, H)           # free reshape back to NCHW


def init_params(key, input_size):
    C = input_size
    C8 = C // 8
    ks = jax.random.split(key, 6)
    s = 0.1
    return dict(
        # PyTorch default for self.gamma is zeros(1); use a nonzero value so the
        # attention branch actually contributes to the output.
        gamma=jnp.array([0.5], jnp.float32),
        # Conv2d(C, C//8, 1) weight (C//8, C, 1, 1) squeezed -> (C//8, C).
        wh=s * jax.random.normal(ks[0], (C8, C), jnp.float32),
        bn_h_w=1.0 + s * jax.random.normal(ks[1], (C8, 1), jnp.float32),
        bn_h_b=s * jax.random.normal(ks[2], (C8, 1), jnp.float32),
        # Conv2d(C//8, C, 1) weight squeezed -> (C, C//8).
        wi=s * jax.random.normal(ks[3], (C, C8), jnp.float32),
        bn_i_w=1.0 + s * jax.random.normal(ks[4], (C, 1), jnp.float32),
        bn_i_b=s * jax.random.normal(ks[5], (C, 1), jnp.float32),
        # Conv biases are omitted on purpose: with training-mode BN they are
        # mathematically no-ops (cancelled by the batch-mean subtraction).
    )


def _reference(x_nchw, att, params):
    """Pure-JAX reference following the PyTorch graph (channels-first layout)."""
    B, C, W, H = x_nchw.shape
    N = W * H
    eps = _EPS
    x = x_nchw.reshape(B, C, N)
    h = jnp.einsum("oc,bcn->bon", params["wh"], x)          # conv_h -> (B, C8, N)
    mu = jnp.mean(h, axis=(0, 2), keepdims=True)
    var = jnp.mean((h - mu) ** 2, axis=(0, 2), keepdims=True)
    h = (h - mu) / jnp.sqrt(var + eps) * params["bn_h_w"] + params["bn_h_b"]
    h = params["gamma"][0] * h
    hb = jnp.einsum("bij,bcj->bci", att, h)                  # bmm(att, h)
    y = jnp.einsum("oc,bcn->bon", params["wi"], hb)          # conv_i -> (B, C, N)
    mu2 = jnp.mean(y, axis=(0, 2), keepdims=True)
    var2 = jnp.mean((y - mu2) ** 2, axis=(0, 2), keepdims=True)
    y = (y - mu2) / jnp.sqrt(var2 + eps) * params["bn_i_w"] + params["bn_i_b"]
    return (y + x).reshape(B, C, W, H)


if __name__ == "__main__":
    key = jax.random.PRNGKey(0)
    kx, ka, kp = jax.random.split(key, 3)

    B, C, W, H = 2, 32, 16, 16          # input_size=32 -> hidden C//8 = 4
    N = W * H

    x = jax.random.normal(kx, (B, C, W, H), jnp.float32)
    # att comes from an upstream SelfAttention module (row-softmaxed scores).
    att = jax.nn.softmax(jax.random.normal(ka, (B, N, N), jnp.float32), axis=-1)

    params = init_params(kp, C)

    y = self_attention_post(x, att, params)
    jax.block_until_ready(y)
    assert y.shape == (B, C, W, H) and y.dtype == jnp.float32

    y_ref = _reference(x, att, params)
    assert bool(jnp.allclose(y, y_ref, rtol=2e-3, atol=2e-3)), "mismatch vs reference"

    print("KERNEL_OK")
</pallas_src>

<mosaic_0001>
module attributes {stable_mosaic.version = 11 : i64} {
  func.func @_self_attn_post_kernel(%arg0: i32, %arg1: i32, %arg2: memref<2x32x256xf32, #tpu.memory_space<vmem>>, %arg3: memref<1x128x256xf32, #tpu.memory_space<vmem>>, %arg4: memref<4x32xf32, #tpu.memory_space<vmem>>, %arg5: memref<4x1xf32, #tpu.memory_space<vmem>>, %arg6: memref<4x1xf32, #tpu.memory_space<vmem>>, %arg7: memref<32x4xf32, #tpu.memory_space<vmem>>, %arg8: memref<32x1xf32, #tpu.memory_space<vmem>>, %arg9: memref<32x1xf32, #tpu.memory_space<vmem>>, %arg10: memref<2x32x256xf32, #tpu.memory_space<vmem>>, %arg11: memref<2x4x256xf32, #tpu.memory_space<vmem>>, %arg12: memref<2x32x256xf32, #tpu.memory_space<vmem>>) attributes {dimension_semantics = [#tpu.dimension_semantics<arbitrary>, #tpu.dimension_semantics<arbitrary>], iteration_bounds = array<i64: 2, 2>, scalar_prefetch = 0 : i64, scratch_operands = 2 : i64, tpu.core_type = #tpu.core_type<tc>, window_params = [{pipeline_mode = #tpu.pipeline_mode<synchronous>, transform_indices = @transform_0, window_bounds = array<i64: 2, 32, 256>}, {transform_indices = @transform_1, window_bounds = array<i64: 1, 128, 256>}, {pipeline_mode = #tpu.pipeline_mode<synchronous>, transform_indices = @transform_2, window_bounds = array<i64: 4, 32>}, {pipeline_mode = #tpu.pipeline_mode<synchronous>, transform_indices = @transform_3, window_bounds = array<i64: 4, 1>}, {pipeline_mode = #tpu.pipeline_mode<synchronous>, transform_indices = @transform_4, window_bounds = array<i64: 4, 1>}, {pipeline_mode = #tpu.pipeline_mode<synchronous>, transform_indices = @transform_5, window_bounds = array<i64: 32, 4>}, {pipeline_mode = #tpu.pipeline_mode<synchronous>, transform_indices = @transform_6, window_bounds = array<i64: 32, 1>}, {pipeline_mode = #tpu.pipeline_mode<synchronous>, transform_indices = @transform_7, window_bounds = array<i64: 32, 1>}, {pipeline_mode = #tpu.pipeline_mode<synchronous>, transform_indices = @transform_8, window_bounds = array<i64: 2, 32, 256>}]} {
    %c0_i32 = arith.constant 0 : i32
    %0 = arith.cmpi eq, %arg0, %c0_i32 : i32
    %c0_i32_0 = arith.constant 0 : i32
    %1 = arith.cmpi eq, %arg1, %c0_i32_0 : i32
    %2 = arith.andi %0, %1 : i1
    %c1_i32 = arith.constant 1 : i32
    %3 = arith.cmpi eq, %arg0, %c1_i32 : i32
    %c1_i32_1 = arith.constant 1 : i32
    %4 = arith.cmpi eq, %arg1, %c1_i32_1 : i32
    %5 = arith.andi %3, %4 : i1
    %6 = arith.extui %2 : i1 to i32
    %c0_i32_2 = arith.constant 0 : i32
    %7 = arith.cmpi ne, %6, %c0_i32_2 : i32
    scf.if %7 {
      %c0_12 = arith.constant 0 : index
      %c0_13 = arith.constant 0 : index
      %25 = vector.load %arg4[%c0_12, %c0_13] : memref<4x32xf32, #tpu.memory_space<vmem>>, vector<4x32xf32>
      %c0_14 = arith.constant 0 : index
      %c0_15 = arith.constant 0 : index
      %c0_16 = arith.constant 0 : index
      %26 = vector.load %arg2[%c0_14, %c0_15, %c0_16] : memref<2x32x256xf32, #tpu.memory_space<vmem>>, vector<1x32x256xf32>
      %27 = vector.shape_cast %26 : vector<1x32x256xf32> to vector<32x256xf32>
      %cst_17 = arith.constant dense<0.000000e+00> : vector<4x256xf32>
      %28 = tpu.matmul %25, %27, %cst_17 {dimension_numbers = #tpu.dot_dimension_numbers<[1], [0], [0], [1], [0, 0, 1, 1], [], []>} : vector<4x32xf32>, vector<32x256xf32>, vector<4x256xf32> -> vector<4x256xf32>
      %c0_18 = arith.constant 0 : index
      %c0_19 = arith.constant 0 : index
      %c0_20 = arith.constant 0 : index
      %29 = vector.load %arg11[%c0_18, %c0_19, %c0_20] : memref<2x4x256xf32, #tpu.memory_space<vmem>>, vector<1x4x256xf32>
      %30 = vector.shape_cast %29 : vector<1x4x256xf32> to vector<4x256xf32>
      %31 = vector.shape_cast %28 : vector<4x256xf32> to vector<1x4x256xf32>
      tpu.vector_store %arg11[%c0_18, %c0_19, %c0_20], %31 {strides = array<i32>} : memref<2x4x256xf32, #tpu.memory_space<vmem>>, vector<1x4x256xf32>,
      %c0_21 = arith.constant 0 : index
      %c0_22 = arith.constant 0 : index
      %32 = vector.load %arg4[%c0_21, %c0_22] : memref<4x32xf32, #tpu.memory_space<vmem>>, vector<4x32xf32>
      %c1 = arith.constant 1 : index
      %c0_23 = arith.constant 0 : index
      %c0_24 = arith.constant 0 : index
      %33 = vector.load %arg2[%c1, %c0_23, %c0_24] : memref<2x32x256xf32, #tpu.memory_space<vmem>>, vector<1x32x256xf32>
      %34 = vector.shape_cast %33 : vector<1x32x256xf32> to vector<32x256xf32>
      %cst_25 = arith.constant dense<0.000000e+00> : vector<4x256xf32>
      %35 = tpu.matmul %32, %34, %cst_25 {dimension_numbers = #tpu.dot_dimension_numbers<[1], [0], [0], [1], [0, 0, 1, 1], [], []>} : vector<4x32xf32>, vector<32x256xf32>, vector<4x256xf32> -> vector<4x256xf32>
      %c1_26 = arith.constant 1 : index
      %c0_27 = arith.constant 0 : index
      %c0_28 = arith.constant 0 : index
      %36 = vector.load %arg11[%c1_26, %c0_27, %c0_28] : memref<2x4x256xf32, #tpu.memory_space<vmem>>, vector<1x4x256xf32>
      %37 = vector.shape_cast %36 : vector<1x4x256xf32> to vector<4x256xf32>
      %38 = vector.shape_cast %35 : vector<4x256xf32> to vector<1x4x256xf32>
      tpu.vector_store %arg11[%c1_26, %c0_27, %c0_28], %38 {strides = array<i32>} : memref<2x4x256xf32, #tpu.memory_space<vmem>>, vector<1x4x256xf32>,
      %c0_29 = arith.constant 0 : index
      %c0_30 = arith.constant 0 : index
      %c0_31 = arith.constant 0 : index
      %39 = vector.load %arg11[%c0_29, %c0_30, %c0_31] : memref<2x4x256xf32, #tpu.memory_space<vmem>>, vector<2x4x256xf32>
      %cst_32 = arith.constant dense<0.000000e+00> : vector<4xf32>
      %40 = vector.multi_reduction <add>, %39, %cst_32 [0, 2] : vector<2x4x256xf32> to vector<4xf32>
      %41 = vector.shape_cast %40 : vector<4xf32> to vector<1x4x1xf32>
      %42 = arith.mulf %39, %39 : vector<2x4x256xf32>
      %cst_33 = arith.constant dense<0.000000e+00> : vector<4xf32>
      %43 = vector.multi_reduction <add>, %42, %cst_33 [0, 2] : vector<2x4x256xf32> to vector<4xf32>
      %44 = vector.shape_cast %43 : vector<4xf32> to vector<1x4x1xf32>
      %cst_34 = arith.constant 0.001953125 : f32
      %45 = vector.broadcast %cst_34 : f32 to vector<1x4x1xf32>
      %46 = arith.mulf %41, %45 : vector<1x4x1xf32>
      %cst_35 = arith.constant 0.001953125 : f32
      %47 = vector.broadcast %cst_35 : f32 to vector<1x4x1xf32>
      %48 = arith.mulf %44, %47 : vector<1x4x1xf32>
      %49 = arith.mulf %46, %46 : vector<1x4x1xf32>
      %50 = arith.subf %48, %49 : vector<1x4x1xf32>
      %cst_36 = arith.constant 0.000000e+00 : f32
      %51 = vector.broadcast %cst_36 : f32 to vector<1x4x1xf32>
      %52 = arith.maximumf %50, %51 : vector<1x4x1xf32>
      %c0_37 = arith.constant 0 : index
      %c0_38 = arith.constant 0 : index
      %53 = vector.load %arg5[%c0_37, %c0_38] : memref<4x1xf32, #tpu.memory_space<vmem>>, vector<4x1xf32>
      %cst_39 = arith.constant 9.99999974E-6 : f32
      %54 = vector.broadcast %cst_39 : f32 to vector<1x4x1xf32>
      %55 = arith.addf %52, %54 : vector<1x4x1xf32>
      %56 = math.rsqrt %55 : vector<1x4x1xf32>
      %57 = vector.shape_cast %53 : vector<4x1xf32> to vector<1x4x1xf32>
      %58 = arith.mulf %57, %56 : vector<1x4x1xf32>
      %c0_40 = arith.constant 0 : index
      %c0_41 = arith.constant 0 : index
      %59 = vector.load %arg6[%c0_40, %c0_41] : memref<4x1xf32, #tpu.memory_space<vmem>>, vector<4x1xf32>
      %60 = arith.mulf %58, %46 : vector<1x4x1xf32>
      %61 = vector.shape_cast %59 : vector<4x1xf32> to vector<1x4x1xf32>
      %62 = arith.subf %61, %60 : vector<1x4x1xf32>
      %63 = vector.broadcast %58 : vector<1x4x1xf32> to vector<2x4x256xf32>
      %64 = arith.mulf %39, %63 : vector<2x4x256xf32>
      %65 = vector.broadcast %62 : vector<1x4x1xf32> to vector<2x4x256xf32>
      %66 = arith.addf %64, %65 : vector<2x4x256xf32>
      %c0_42 = arith.constant 0 : index
      %c0_43 = arith.constant 0 : index
      %c0_44 = arith.constant 0 : index
      %67 = vector.load %arg11[%c0_42, %c0_43, %c0_44] : memref<2x4x256xf32, #tpu.memory_space<vmem>>, vector<2x4x256xf32>
      tpu.vector_store %arg11[%c0_42, %c0_43, %c0_44], %66 {strides = array<i32>} : memref<2x4x256xf32, #tpu.memory_space<vmem>>, vector<2x4x256xf32>,
    } else {
    }
    %8 = arith.index_cast %arg0 : i32 to index
    %c0 = arith.constant 0 : index
    %c0_3 = arith.constant 0 : index
    %9 = vector.load %arg11[%8, %c0, %c0_3] : memref<2x4x256xf32, #tpu.memory_space<vmem>>, vector<1x4x256xf32>
    %10 = vector.shape_cast %9 : vector<1x4x256xf32> to vector<4x256xf32>
    %c0_4 = arith.constant 0 : index
    %c0_5 = arith.constant 0 : index
    %c0_6 = arith.constant 0 : index
    %11 = vector.load %arg3[%c0_4, %c0_5, %c0_6] : memref<1x128x256xf32, #tpu.memory_space<vmem>>, vector<1x128x256xf32>
    %12 = vector.shape_cast %11 : vector<1x128x256xf32> to vector<128x256xf32>
    %cst = arith.constant dense<0.000000e+00> : vector<4x128xf32>
    %13 = tpu.matmul %10, %12, %cst {dimension_numbers = #tpu.dot_dimension_numbers<[1], [1], [0], [0], [0, 0, 1, 0], [], []>} : vector<4x256xf32>, vector<128x256xf32>, vector<4x128xf32> -> vector<4x128xf32>
    %c0_7 = arith.constant 0 : index
    %c0_8 = arith.constant 0 : index
    %14 = vector.load %arg7[%c0_7, %c0_8] : memref<32x4xf32, #tpu.memory_space<vmem>>, vector<32x4xf32>
    %cst_9 = arith.constant dense<0.000000e+00> : vector<32x128xf32>
    %15 = tpu.matmul %14, %13, %cst_9 {dimension_numbers = #tpu.dot_dimension_numbers<[1], [0], [0], [1], [0, 0, 1, 1], [], []>} : vector<32x4xf32>, vector<4x128xf32>, vector<32x128xf32> -> vector<32x128xf32>
    %c128_i32 = arith.constant 128 : i32
    %16 = arith.muli %arg1, %c128_i32 : i32
    %17 = tpu.assume_multiple %16, 128 : i32
    %18 = arith.index_cast %arg0 : i32 to index
    %c0_10 = arith.constant 0 : index
    %19 = arith.index_cast %17 : i32 to index
    %20 = vector.load %arg12[%18, %c0_10, %19] : memref<2x32x256xf32, #tpu.memory_space<vmem>>, vector<1x32x128xf32>
    %21 = vector.shape_cast %20 : vector<1x32x128xf32> to vector<32x128xf32>
    %22 = vector.shape_cast %15 : vector<32x128xf32> to vector<1x32x128xf32>
    tpu.vector_store %arg12[%18, %c0_10, %19], %22 {strides = array<i32>} : memref<2x32x256xf32, #tpu.memory_space<vmem>>, vector<1x32x128xf32>,
    %23 = arith.extui %5 : i1 to i32
    %c0_i32_11 = arith.constant 0 : i32
    %24 = arith.cmpi ne, %23, %c0_i32_11 : i32
    scf.if %24 {
      %c0_12 = arith.constant 0 : index
      %c0_13 = arith.constant 0 : index
      %c0_14 = arith.constant 0 : index
      %25 = vector.load %arg12[%c0_12, %c0_13, %c0_14] : memref<2x32x256xf32, #tpu.memory_space<vmem>>, vector<2x32x256xf32>
      %cst_15 = arith.constant dense<0.000000e+00> : vector<32xf32>
      %26 = vector.multi_reduction <add>, %25, %cst_15 [0, 2] : vector<2x32x256xf32> to vector<32xf32>
      %27 = vector.shape_cast %26 : vector<32xf32> to vector<1x32x1xf32>
      %28 = arith.mulf %25, %25 : vector<2x32x256xf32>
      %cst_16 = arith.constant dense<0.000000e+00> : vector<32xf32>
      %29 = vector.multi_reduction <add>, %28, %cst_16 [0, 2] : vector<2x32x256xf32> to vector<32xf32>
      %30 = vector.shape_cast %29 : vector<32xf32> to vector<1x32x1xf32>
      %cst_17 = arith.constant 0.001953125 : f32
      %31 = vector.broadcast %cst_17 : f32 to vector<1x32x1xf32>
      %32 = arith.mulf %27, %31 : vector<1x32x1xf32>
      %cst_18 = arith.constant 0.001953125 : f32
      %33 = vector.broadcast %cst_18 : f32 to vector<1x32x1xf32>
      %34 = arith.mulf %30, %33 : vector<1x32x1xf32>
      %35 = arith.mulf %32, %32 : vector<1x32x1xf32>
      %36 = arith.subf %34, %35 : vector<1x32x1xf32>
      %cst_19 = arith.constant 0.000000e+00 : f32
      %37 = vector.broadcast %cst_19 : f32 to vector<1x32x1xf32>
      %38 = arith.maximumf %36, %37 : vector<1x32x1xf32>
      %c0_20 = arith.constant 0 : index
      %c0_21 = arith.constant 0 : index
      %39 = vector.load %arg8[%c0_20, %c0_21] : memref<32x1xf32, #tpu.memory_space<vmem>>, vector<32x1xf32>
      %cst_22 = arith.constant 9.99999974E-6 : f32
      %40 = vector.broadcast %cst_22 : f32 to vector<1x32x1xf32>
      %41 = arith.addf %38, %40 : vector<1x32x1xf32>
      %42 = math.rsqrt %41 : vector<1x32x1xf32>
      %43 = vector.shape_cast %39 : vector<32x1xf32> to vector<1x32x1xf32>
      %44 = arith.mulf %43, %42 : vector<1x32x1xf32>
      %c0_23 = arith.constant 0 : index
      %c0_24 = arith.constant 0 : index
      %45 = vector.load %arg9[%c0_23, %c0_24] : memref<32x1xf32, #tpu.memory_space<vmem>>, vector<32x1xf32>
      %46 = arith.mulf %44, %32 : vector<1x32x1xf32>
      %47 = vector.shape_cast %45 : vector<32x1xf32> to vector<1x32x1xf32>
      %48 = arith.subf %47, %46 : vector<1x32x1xf32>
      %49 = vector.broadcast %44 : vector<1x32x1xf32> to vector<2x32x256xf32>
      %50 = arith.mulf %25, %49 : vector<2x32x256xf32>
      %51 = vector.broadcast %48 : vector<1x32x1xf32> to vector<2x32x256xf32>
      %52 = arith.addf %50, %51 : vector<2x32x256xf32>
      %c0_25 = arith.constant 0 : index
      %c0_26 = arith.constant 0 : index
      %c0_27 = arith.constant 0 : index
      %53 = vector.load %arg2[%c0_25, %c0_26, %c0_27] : memref<2x32x256xf32, #tpu.memory_space<vmem>>, vector<2x32x256xf32>
      %54 = arith.addf %52, %53 : vector<2x32x256xf32>
      %c0_28 = arith.constant 0 : index
      %c0_29 = arith.constant 0 : index
      %c0_30 = arith.constant 0 : index
      %55 = vector.load %arg10[%c0_28, %c0_29, %c0_30] : memref<2x32x256xf32, #tpu.memory_space<vmem>>, vector<2x32x256xf32>
      tpu.vector_store %arg10[%c0_28, %c0_29, %c0_30], %54 {strides = array<i32>} : memref<2x32x256xf32, #tpu.memory_space<vmem>>, vector<2x32x256xf32>,
    } else {
    }
    return
  }
  func.func @transform_0(%arg0: i32, %arg1: i32) -> (i32, i32, i32) {
    %c0_i32 = arith.constant 0 : i32
    %c0_i32_0 = arith.constant 0 : i32
    %c0_i32_1 = arith.constant 0 : i32
    %c0_i32_2 = arith.constant 0 : i32
    return %c0_i32, %c0_i32_0, %c0_i32_1 : i32, i32, i32
  }
  func.func @transform_1(%arg0: i32, %arg1: i32) -> (i32, i32, i32) {
    %c0_i32 = arith.constant 0 : i32
    %c0_i32_0 = arith.constant 0 : i32
    return %arg0, %arg1, %c0_i32 : i32, i32, i32
  }
  func.func @transform_2(%arg0: i32, %arg1: i32) -> (i32, i32) {
    %c0_i32 = arith.constant 0 : i32
    %c0_i32_0 = arith.constant 0 : i32
    %c0_i32_1 = arith.constant 0 : i32
    return %c0_i32, %c0_i32_0 : i32, i32
  }
  func.func @transform_3(%arg0: i32, %arg1: i32) -> (i32, i32) {
    %c0_i32 = arith.constant 0 : i32
    %c0_i32_0 = arith.constant 0 : i32
    %c0_i32_1 = arith.constant 0 : i32
    return %c0_i32, %c0_i32_0 : i32, i32
  }
  func.func @transform_4(%arg0: i32, %arg1: i32) -> (i32, i32) {
    %c0_i32 = arith.constant 0 : i32
    %c0_i32_0 = arith.constant 0 : i32
    %c0_i32_1 = arith.constant 0 : i32
    return %c0_i32, %c0_i32_0 : i32, i32
  }
  func.func @transform_5(%arg0: i32, %arg1: i32) -> (i32, i32) {
    %c0_i32 = arith.constant 0 : i32
    %c0_i32_0 = arith.constant 0 : i32
    %c0_i32_1 = arith.constant 0 : i32
    return %c0_i32, %c0_i32_0 : i32, i32
  }
  func.func @transform_6(%arg0: i32, %arg1: i32) -> (i32, i32) {
    %c0_i32 = arith.constant 0 : i32
    %c0_i32_0 = arith.constant 0 : i32
    %c0_i32_1 = arith.constant 0 : i32
    return %c0_i32, %c0_i32_0 : i32, i32
  }
  func.func @transform_7(%arg0: i32, %arg1: i32) -> (i32, i32) {
    %c0_i32 = arith.constant 0 : i32
    %c0_i32_0 = arith.constant 0 : i32
    %c0_i32_1 = arith.constant 0 : i32
    return %c0_i32, %c0_i32_0 : i32, i32
  }
  func.func @transform_8(%arg0: i32, %arg1: i32) -> (i32, i32, i32) {
    %c0_i32 = arith.constant 0 : i32
    %c0_i32_0 = arith.constant 0 : i32
    %c0_i32_1 = arith.constant 0 : i32
    %c0_i32_2 = arith.constant 0 : i32
    return %c0_i32, %c0_i32_0, %c0_i32_1 : i32, i32, i32
  }
}

</mosaic_0001>

<llo_original>
// kernel: tpu_custom_call.1
$region0: #{tpu_custom_call.1}
  #allocation0 [shape = 'u32[]', space=smem, size = 0x4, offset = 0x4, fixed_abs, tag = 'smem constant byte address 0x4 - core index']
  #allocation1 [shape = 'u32[144,128]{1,0:T(1,128)}', space=vmem, size = 0x12000, scoped, tag = 'internal scratch']
  #allocation2 [shape = 'f32[2,4,256]{2,1,0:T(4,128)}', space=vmem, size = 0x2000, scoped, tag = 'scratch operand']
  #allocation3 [shape = 'f32[2,32,256]{2,1,0:T(8,128)}', space=vmem, size = 0x10000, scoped, tag = 'scratch operand']
  %s0 = inlined_call_operand.hbm [shape: f32[2,32,256], index: 0, kind: input, shape index: {}]
  %s1 = inlined_call_operand.hbm [shape: f32[2,256,256], index: 1, kind: input, shape index: {}]
  %s2 = inlined_call_operand.vmem [shape: f32[4,32], index: 2, kind: input, shape index: {}]
  %s3 = inlined_call_operand.vmem [shape: f32[4,1], index: 3, kind: input, shape index: {}]
  %s4 = inlined_call_operand.vmem [shape: f32[4,1], index: 4, kind: input, shape index: {}]
  %s5 = inlined_call_operand.vmem [shape: f32[32,4], index: 5, kind: input, shape index: {}]
  %s6 = inlined_call_operand.vmem [shape: f32[32,1], index: 6, kind: input, shape index: {}]
  %s7 = inlined_call_operand.vmem [shape: f32[32,1], index: 7, kind: input, shape index: {}]
  %s8 = inlined_call_operand.hbm [shape: f32[2,32,256], index: 8, kind: output, shape index: {}]
  %s9 = sld [smem:[#allocation0]]
  $region81: #{tpu_custom_call.1} parent=0
    _
  %s11 = ssub.s32 1, %s9
  %s12 = scalar_select 0, %s11, %s9
  $region1: #{tpu_custom_call.1} parent=0
    #allocation4 [shape = 'u8[65536]{0}', space=vmem, size = 0x10000, scoped, tag = 'input window, operand 0, single buffered']
    #allocation5 [shape = 's32[2]{0}', space=sflag, size = 0x8, scoped, tag = 'scoped memory for tpu_custom_call.1']
    #allocation6 [shape = 's32[2]{0}', space=sflag, size = 0x8, scoped, tag = 'scoped memory for tpu_custom_call.1']
    #allocation7 [shape = 'u8[262144]{0}', space=vmem, size = 0x40000, scoped, tag = 'input window, operand 1']
    #allocation8 [shape = 's32[2]{0}', space=sflag, size = 0x8, scoped, tag = 'scoped memory for tpu_custom_call.1']
    #allocation9 [shape = 'u8[65536]{0}', space=vmem, size = 0x10000, scoped, tag = 'output window, operand 0, single buffered']
    %13 = vsyncpa [#allocation5], 0
    %14 = vsyncpa [#allocation8], 0
    %s15 = scalar_lea.sflag [#allocation8], 1
    %16 = vsyncpa %s15, 0
    %17 = vsyncpa [#allocation6], 0
    loop: start=0, step=1, limit=6
    $region2: #{tpu_custom_call.1} parent=1 // loop_pre_header
      _
    $region3: #{tpu_custom_call.1} parent=1 // loop_header
      %s19 = sphi 0, %s23
      %p20 = scmp.ge.s32.totalorder %s19, 6
      %s26 = sphi 0, %s38
      %s27 = sphi 0, %s34
      %s28 = sphi 0, %s26
      %s29 = sphi 0, %s27
      %s30 = sphi 0, %s28
      %s31 = sphi 0, %s29
      %s39 = sphi 0, %s39
      %s41 = sphi 0, %s39
      %s42 = sphi 0, %s41
      %s56 = sphi 0, %s42
      %s64 = sphi 0, %s66
      %s67 = sphi 0, %s64
      %s68 = sphi 0, %s67
      %s84 = sphi 0, %s68
      %s88 = sphi 0, %s88
      %s90 = sphi 0, %s88
      %s91 = sphi 0, %s90
      %s105 = sphi 0, %s91
      %s109 = sphi 0, %s109
      %s111 = sphi 0, %s109
      %s112 = sphi 0, %s111
      %s126 = sphi 0, %s112
      %s130 = sphi 0, %s130
      %s132 = sphi 0, %s130
      %s133 = sphi 0, %s132
      %s147 = sphi 0, %s133
      %s151 = sphi 0, %s151
      %s153 = sphi 0, %s151
      %s154 = sphi 0, %s153
      %s168 = sphi 0, %s154
      %s172 = sphi 0, %s172
      %s174 = sphi 0, %s172
      %s175 = sphi 0, %s174
      %s189 = sphi 0, %s175
      %s193 = sphi 0, %s193
      %s195 = sphi 0, %s193
      %s196 = sphi 0, %s195
      %s210 = sphi 0, %s196
      %s214 = sphi 0, %s214
      %s216 = sphi 0, %s214
      %s217 = sphi 0, %s216
      %s231 = sphi 0, %s217
    $region4: #{tpu_custom_call.1} parent=1 // loop_header_branch
      %22 = sbr.rel (%p20) target = $region8
    $region5: #{tpu_custom_call.1} parent=1 // loop_body
      %s24 = ssub.s32 %s19, 1
      %s25 = ssub.s32 %s19, 2
      %s32 = sadd.s32 1, %s27
      %p33 = scmp.ge.s32.totalorder %s32, 2
      %s34 = scalar_select %p33, 0, %s32
      %s35 = sadd.s32 1, %s26
      %s36 = scalar_select %p33, %s35, %s26
      %p37 = scmp.ge.s32.totalorder %s36, 2
      %s38 = scalar_select %p37, 0, %s36
      %s40 = sadd.s32 %s39, 1
      %p43 = scmp.eq.s32.totalorder %s19, 3
      %p44 = scmp.ne.s32.totalorder %s39, %s41
      %p45 = scmp.eq.s32.totalorder %s19, 0
      %p46 = por %p44, %p45
      %p47 = scmp.ne.s32.totalorder %s39, %s41
      %p48 = scmp.eq.s32.totalorder %s24, 3
      %p49 = por %p47, %p48
      %p50 = scmp.ne.s32.totalorder %s41, %s42
      %p51 = scmp.eq.s32.totalorder %s24, 0
      %p52 = por %p50, %p51
      %p53 = scmp.ne.s32.totalorder %s41, %s42
      %p54 = scmp.eq.s32.totalorder %s25, 3
      %p55 = por %p53, %p54
      %p57 = scmp.ne.s32.totalorder %s42, %s56
      %p58 = scmp.eq.s32.totalorder %s25, 0
      %p59 = por %p57, %p58
      %s60 = ssub.s32 %s26, %s38
      %s61 = ssub.s32 %s27, %s34
      %s62 = sor.u32 %s60, %s61
      %p63 = scmp.eq.s32.totalorder %s62, 0
      %s65 = sadd.s32 %s64, 1
      %s66 = scalar_select %p63, %s64, %s65
      %p69 = pneg %p63
      %p70 = scmp.eq.s32.totalorder %s19, 3
      %p71 = por %p69, %p70
      %p72 = scmp.ne.s32.totalorder %s64, %s67
      %p73 = scmp.eq.s32.totalorder %s19, 0
      %p74 = por %p72, %p73
      %p75 = scmp.ne.s32.totalorder %s64, %s67
      %p76 = scmp.eq.s32.totalorder %s24, 3
      %p77 = por %p75, %p76
      %p78 = scmp.ne.s32.totalorder %s67, %s68
      %p79 = scmp.eq.s32.totalorder %s24, 0
      %p80 = por %p78, %p79
      %p81 = scmp.ne.s32.totalorder %s67, %s68
      %p82 = scmp.eq.s32.totalorder %s25, 3
      %p83 = por %p81, %p82
      %p85 = scmp.ne.s32.totalorder %s68, %s84
      %p86 = scmp.eq.s32.totalorder %s25, 0
      %p87 = por %p85, %p86
      %s89 = sadd.s32 %s88, 1
      %p92 = scmp.eq.s32.totalorder %s19, 3
      %p93 = scmp.ne.s32.totalorder %s88, %s90
      %p94 = scmp.eq.s32.totalorder %s19, 0
      %p95 = por %p93, %p94
      %p96 = scmp.ne.s32.totalorder %s88, %s90
      %p97 = scmp.eq.s32.totalorder %s24, 3
      %p98 = por %p96, %p97
      %p99 = scmp.ne.s32.totalorder %s90, %s91
      %p100 = scmp.eq.s32.totalorder %s24, 0
      %p101 = por %p99, %p100
      %p102 = scmp.ne.s32.totalorder %s90, %s91
      %p103 = scmp.eq.s32.totalorder %s25, 3
      %p104 = por %p102, %p103
      %p106 = scmp.ne.s32.totalorder %s91, %s105
      %p107 = scmp.eq.s32.totalorder %s25, 0
      %p108 = por %p106, %p107
      %s110 = sadd.s32 %s109, 1
      %p113 = scmp.eq.s32.totalorder %s19, 3
      %p114 = scmp.ne.s32.totalorder %s109, %s111
      %p115 = scmp.eq.s32.totalorder %s19, 0
      %p116 = por %p114, %p115
      %p117 = scmp.ne.s32.totalorder %s109, %s111
      %p118 = scmp.eq.s32.totalorder %s24, 3
      %p119 = por %p117, %p118
      %p120 = scmp.ne.s32.totalorder %s111, %s112
      %p121 = scmp.eq.s32.totalorder %s24, 0
      %p122 = por %p120, %p121
      %p123 = scmp.ne.s32.totalorder %s111, %s112
      %p124 = scmp.eq.s32.totalorder %s25, 3
      %p125 = por %p123, %p124
      %p127 = scmp.ne.s32.totalorder %s112, %s126
      %p128 = scmp.eq.s32.totalorder %s25, 0
      %p129 = por %p127, %p128
      %s131 = sadd.s32 %s130, 1
      %p134 = scmp.eq.s32.totalorder %s19, 3
      %p135 = scmp.ne.s32.totalorder %s130, %s132
      %p136 = scmp.eq.s32.totalorder %s19, 0
      %p137 = por %p135, %p136
      %p138 = scmp.ne.s32.totalorder %s130, %s132
      %p139 = scmp.eq.s32.totalorder %s24, 3
      %p140 = por %p138, %p139
      %p141 = scmp.ne.s32.totalorder %s132, %s133
      %p142 = scmp.eq.s32.totalorder %s24, 0
      %p143 = por %p141, %p142
      %p144 = scmp.ne.s32.totalorder %s132, %s133
      %p145 = scmp.eq.s32.totalorder %s25, 3
      %p146 = por %p144, %p145
      %p148 = scmp.ne.s32.totalorder %s133, %s147
      %p149 = scmp.eq.s32.totalorder %s25, 0
      %p150 = por %p148, %p149
      %s152 = sadd.s32 %s151, 1
      %p155 = scmp.eq.s32.totalorder %s19, 3
      %p156 = scmp.ne.s32.totalorder %s151, %s153
      %p157 = scmp.eq.s32.totalorder %s19, 0
      %p158 = por %p156, %p157
      %p159 = scmp.ne.s32.totalorder %s151, %s153
      %p160 = scmp.eq.s32.totalorder %s24, 3
      %p161 = por %p159, %p160
      %p162 = scmp.ne.s32.totalorder %s153, %s154
      %p163 = scmp.eq.s32.totalorder %s24, 0
      %p164 = por %p162, %p163
      %p165 = scmp.ne.s32.totalorder %s153, %s154
      %p166 = scmp.eq.s32.totalorder %s25, 3
      %p167 = por %p165, %p166
      %p169 = scmp.ne.s32.totalorder %s154, %s168
      %p170 = scmp.eq.s32.totalorder %s25, 0
      %p171 = por %p169, %p170
      %s173 = sadd.s32 %s172, 1
      %p176 = scmp.eq.s32.totalorder %s19, 3
      %p177 = scmp.ne.s32.totalorder %s172, %s174
      %p178 = scmp.eq.s32.totalorder %s19, 0
      %p179 = por %p177, %p178
      %p180 = scmp.ne.s32.totalorder %s172, %s174
      %p181 = scmp.eq.s32.totalorder %s24, 3
      %p182 = por %p180, %p181
      %p183 = scmp.ne.s32.totalorder %s174, %s175
      %p184 = scmp.eq.s32.totalorder %s24, 0
      %p185 = por %p183, %p184
      %p186 = scmp.ne.s32.totalorder %s174, %s175
      %p187 = scmp.eq.s32.totalorder %s25, 3
      %p188 = por %p186, %p187
      %p190 = scmp.ne.s32.totalorder %s175, %s189
      %p191 = scmp.eq.s32.totalorder %s25, 0
      %p192 = por %p190, %p191
      %s194 = sadd.s32 %s193, 1
      %p197 = scmp.eq.s32.totalorder %s19, 3
      %p198 = scmp.ne.s32.totalorder %s193, %s195
      %p199 = scmp.eq.s32.totalorder %s19, 0
      %p200 = por %p198, %p199
      %p201 = scmp.ne.s32.totalorder %s193, %s195
      %p202 = scmp.eq.s32.totalorder %s24, 3
      %p203 = por %p201, %p202
      %p204 = scmp.ne.s32.totalorder %s195, %s196
      %p205 = scmp.eq.s32.totalorder %s24, 0
      %p206 = por %p204, %p205
      %p207 = scmp.ne.s32.totalorder %s195, %s196
      %p208 = scmp.eq.s32.totalorder %s25, 3
      %p209 = por %p207, %p208
      %p211 = scmp.ne.s32.totalorder %s196, %s210
      %p212 = scmp.eq.s32.totalorder %s25, 0
      %p213 = por %p211, %p212
      %s215 = sadd.s32 %s214, 1
      %p218 = scmp.eq.s32.totalorder %s19, 3
      %p219 = scmp.ne.s32.totalorder %s214, %s216
      %p220 = scmp.eq.s32.totalorder %s19, 0
      %p221 = por %p219, %p220
      %p222 = scmp.ne.s32.totalorder %s214, %s216
      %p223 = scmp.eq.s32.totalorder %s24, 3
      %p224 = por %p222, %p223
      %p225 = scmp.ne.s32.totalorder %s216, %s217
      %p226 = scmp.eq.s32.totalorder %s24, 0
      %p227 = por %p225, %p226
      %p228 = scmp.ne.s32.totalorder %s216, %s217
      %p229 = scmp.eq.s32.totalorder %s25, 3
      %p230 = por %p228, %p229
      %p232 = scmp.ne.s32.totalorder %s217, %s231
      %p233 = scmp.eq.s32.totalorder %s25, 0
      %p234 = por %p232, %p233
      %p235 = scmp.le.s32.totalorder 1, %s19
      %p236 = scmp.lt.s32.totalorder %s19, 5
      %p237 = pnand %p235, %p236
      %p238 = pneg %p237
      // Predicated region
      $region9: #{tpu_custom_call.1} parent=5 // pred_check
        _
      $region10: #{tpu_custom_call.1} parent=5 // pred_check_branch
        %240 = sbr.rel (%p237) target = $region12
      $region11: #{tpu_custom_call.1} parent=5 // pred_region
        %s241 = ssub.s32 %s19, 1
        // Predicated region
        $region13: #{tpu_custom_call.1} parent=11 // pred_check
          %p242 = pneg %p52
        $region14: #{tpu_custom_call.1} parent=11 // pred_check_branch
          %244 = sbr.rel (%p242) target = $region16
        $region15: #{tpu_custom_call.1} parent=11 // pred_region
          %s246 = ssub.s32 2048, 2048
          %247 = vsyncadd [#allocation5], %s246
          %s248 = sshll.u32 [#allocation4], 4
          %s249 = int_to_ptr.vmem [resolvable:$true] %s248
          %254 = dma.hbm_to_vmem [thread:$0]  %s0, 2048, %s249, [#allocation5], 256, 256, 16
        $region16: #{tpu_custom_call.1} parent=11 // pred_fallthru
          _
        // Predicated region
        $region17: #{tpu_custom_call.1} parent=11 // pred_check
          %p255 = pneg %p101
        $region18: #{tpu_custom_call.1} parent=11 // pred_check_branch
          %257 = sbr.rel (%p255) target = $region20
        $region19: #{tpu_custom_call.1} parent=11 // pred_region
          _
        $region20: #{tpu_custom_call.1} parent=11 // pred_fallthru
          _
        // Predicated region
        $region21: #{tpu_custom_call.1} parent=11 // pred_check
          %p258 = pneg %p122
        $region22: #{tpu_custom_call.1} parent=11 // pred_check_branch
          %260 = sbr.rel (%p258) target = $region24
        $region23: #{tpu_custom_call.1} parent=11 // pred_region
          _
        $region24: #{tpu_custom_call.1} parent=11 // pred_fallthru
          _
        // Predicated region
        $region25: #{tpu_custom_call.1} parent=11 // pred_check
          %p261 = pneg %p143
        $region26: #{tpu_custom_call.1} parent=11 // pred_check_branch
          %263 = sbr.rel (%p261) target = $region28
        $region27: #{tpu_custom_call.1} parent=11 // pred_region
          _
        $region28: #{tpu_custom_call.1} parent=11 // pred_fallthru
          _
        // Predicated region
        $region29: #{tpu_custom_call.1} parent=11 // pred_check
          %p264 = pneg %p164
        $region30: #{tpu_custom_call.1} parent=11 // pred_check_branch
          %266 = sbr.rel (%p264) target = $region32
        $region31: #{tpu_custom_call.1} parent=11 // pred_region
          _
        $region32: #{tpu_custom_call.1} parent=11 // pred_fallthru
          _
        // Predicated region
        $region33: #{tpu_custom_call.1} parent=11 // pred_check
          %p267 = pneg %p185
        $region34: #{tpu_custom_call.1} parent=11 // pred_check_branch
          %269 = sbr.rel (%p267) target = $region36
        $region35: #{tpu_custom_call.1} parent=11 // pred_region
          _
        $region36: #{tpu_custom_call.1} parent=11 // pred_fallthru
          _
        // Predicated region
        $region37: #{tpu_custom_call.1} parent=11 // pred_check
          %p270 = pneg %p206
        $region38: #{tpu_custom_call.1} parent=11 // pred_check_branch
          %272 = sbr.rel (%p270) target = $region40
        $region39: #{tpu_custom_call.1} parent=11 // pred_region
          _
        $region40: #{tpu_custom_call.1} parent=11 // pred_fallthru
          _
      $region12: #{tpu_custom_call.1} parent=5 // pred_fallthru
        _
      %p273 = scmp.lt.s32.totalorder %s19, 4
      // Predicated region
      $region41: #{tpu_custom_call.1} parent=5 // pred_check
        %p274 = pneg %p273
      $region42: #{tpu_custom_call.1} parent=5 // pred_check_branch
        %276 = sbr.rel (%p274) target = $region44
      $region43: #{tpu_custom_call.1} parent=5 // pred_region
        // Predicated region
        $region45: #{tpu_custom_call.1} parent=43 // pred_check
          %p277 = pneg %p74
        $region46: #{tpu_custom_call.1} parent=43 // pred_check_branch
          %279 = sbr.rel (%p277) target = $region48
        $region47: #{tpu_custom_call.1} parent=43 // pred_region
          %s280 = sand.u32 %s64, 1
          %s281 = scalar_lea.sflag [#allocation8], %s280
          %s282 = sand.u32 %s64, 1
          %s283 = smul.addr %s282, 256
          %s284 = scalar_lea.vmem [#allocation7], %s283
          %s285 = smul.u32 16, %s27
          %s287 = ssub.s32 4096, 4096
          %288 = vsyncadd %s281, %s287
          %s289 = smul.addr %s285, 2
          %s290 = smul.addr %s26, 64
          %s291 = sadd.s32 %s289, %s290
          %s292 = smul.addr %s291, 128
          %s293 = scalar_lea.hbm %s1, %s292
          %s294 = sshll.u32 %s284, 4
          %s295 = int_to_ptr.vmem [resolvable:$true] %s294
          %300 = dma.hbm_to_vmem [thread:$0]  %s293, 4096, %s295, %s281, 256, 256, 16
        $region48: #{tpu_custom_call.1} parent=43 // pred_fallthru
          _
      $region44: #{tpu_custom_call.1} parent=5 // pred_fallthru
        _
      %p301 = scmp.le.s32.totalorder 1, %s19
      %p302 = scmp.lt.s32.totalorder %s19, 5
      %p303 = pnand %p301, %p302
      %p304 = pneg %p303
      // Predicated region
      $region49: #{tpu_custom_call.1} parent=5 // pred_check
        _
      $region50: #{tpu_custom_call.1} parent=5 // pred_check_branch
        %306 = sbr.rel (%p303) target = $region52
      $region51: #{tpu_custom_call.1} parent=5 // pred_region
        %s307 = ssub.s32 %s19, 1
        // Predicated region
        $region53: #{tpu_custom_call.1} parent=51 // pred_check
          %p308 = pneg %p52
        $region54: #{tpu_custom_call.1} parent=51 // pred_check_branch
          %310 = sbr.rel (%p308) target = $region56
        $region55: #{tpu_custom_call.1} parent=51 // pred_region
          %311 = dma.done [#allocation5], 2048
        $region56: #{tpu_custom_call.1} parent=51 // pred_fallthru
          _
        %s312 = sand.u32 %s67, 1
        %s313 = scalar_lea.sflag [#allocation8], %s312
        %s314 = sand.u32 %s67, 1
        %s315 = smul.addr %s314, 256
        %s316 = scalar_lea.vmem [#allocation7], %s315
        // Predicated region
        $region57: #{tpu_custom_call.1} parent=51 // pred_check
          %p317 = pneg %p80
        $region58: #{tpu_custom_call.1} parent=51 // pred_check_branch
          %319 = sbr.rel (%p317) target = $region60
        $region59: #{tpu_custom_call.1} parent=51 // pred_region
          %320 = dma.done %s313, 4096
        $region60: #{tpu_custom_call.1} parent=51 // pred_fallthru
          _
        %p321 = pneg %p52
        %p322 = pneg %p49
        %s323 = sand.u32 %s67, 1
        %s324 = scalar_lea.sflag [#allocation8], %s323
        %s325 = sand.u32 %s67, 1
        %s326 = smul.addr %s325, 256
        %s327 = scalar_lea.vmem [#allocation7], %s326
        %p328 = pneg %p80
        %p329 = pneg %p77
        %p330 = pneg %p101
        %p331 = pneg %p98
        %p332 = pneg %p122
        %p333 = pneg %p119
        %p334 = pneg %p143
        %p335 = pneg %p140
        %p336 = pneg %p164
        %p337 = pneg %p161
        %p338 = pneg %p185
        %p339 = pneg %p182
        %p340 = pneg %p206
        %p341 = pneg %p203
        %p342 = pneg %p227
        %p343 = pneg %p224
        %s344 = smul.u32 16, %s29
        %p345 = scmp.eq.s32.totalorder %s28, 0
        %p346 = scmp.eq.s32.totalorder %s29, 0
        %p347 = pnand %p345, %p346
        %p348 = pneg %p347
        %p349 = scmp.eq.s32.totalorder %s28, 1
        %p350 = scmp.eq.s32.totalorder %s29, 1
        %p351 = pnand %p349, %p350
        %p352 = pneg %p351
        // Predicated region
        $region61: #{tpu_custom_call.1} parent=51 // pred_check
          _
        $region62: #{tpu_custom_call.1} parent=51 // pred_check_branch
          %354 = sbr.rel (%p347) target = $region64
        $region63: #{tpu_custom_call.1} parent=51 // pred_region
          %v355 = vld [vmem:[%s2] sm:$0xf]
          %v356 = vld [vmem:[#allocation4] sm:$0xff]
          %v357 = vld [vmem:[#allocation4 + $0x8] sm:$0xff]
          %v358 = vld [vmem:[#allocation4 + $0x10] sm:$0xff]
          %v359 = vld [vmem:[#allocation4 + $0x18] sm:$0xff]
          %v360 = vld [vmem:[#allocation4 + $0x20] sm:$0xff]
          %v361 = vld [vmem:[#allocation4 + $0x28] sm:$0xff]
          %v362 = vld [vmem:[#allocation4 + $0x30] sm:$0xff]
          %v363 = vld [vmem:[#allocation4 + $0x38] sm:$0xff]
          %vm364 = vcmask 261120
          %v366 = vsel %vm364, %v355, 0
          %368 = vmatprep.subr.mxu0 %v357
          %369 = vmatpush1.msra.mxu0 %v356
          %370 = vmatprep.subr.mxu0 %v359
          %371 = vmatpush1.msra.mxu0 %v358
          %372 = vmatprep.subr.mxu0 %v361
          %373 = vmatpush1.msra.mxu0 %v360
          %374 = vmatprep.subr.mxu0 %v363
          %375 = vmatpush1.msra.mxu0 %v362
          %376 = vmatprep.subr.mxu0 0.0
          %377 = vmatpush1.msra.mxu0 0.0
          %378 = vmatprep.subr.mxu0 0.0
          %379 = vmatpush1.msra.mxu0 0.0
          %380 = vmatprep.subr.mxu0 0.0
          %381 = vmatpush1.msra.mxu0 0.0
          %382 = vmatprep.subr.mxu0 0.0
          %383 = vmatpush1.msra.mxu0 0.0
          %384 = vmatprep.subr.mxu0 0.0
          %385 = vmatpush1.msra.mxu0 0.0
          %386 = vmatprep.subr.mxu0 0.0
          %387 = vmatpush1.msra.mxu0 0.0
          %388 = vmatprep.subr.mxu0 0.0
          %389 = vmatpush1.msra.mxu0 0.0
          %390 = vmatprep.subr.mxu0 0.0
          %391 = vmatpush1.msra.mxu0 0.0
          %392 = vmatprep.subr.mxu0 0.0
          %393 = vmatpush1.msra.mxu0 0.0
          %394 = vmatprep.subr.mxu0 0.0
          %395 = vmatpush1.msra.mxu0 0.0
          %396 = vmatprep.subr.mxu0 0.0
          %397 = vmatpush1.msra.mxu0 0.0
          %398 = vmatprep.subr.mxu0 0.0
          %399 = vmatpush1.msra.mxu0 0.0
          %400 = vmatprep.subr.mxu0 0.0
          %401 = vmatpush1.msra.mxu0 0.0
          %402 = vmatprep.subr.mxu0 0.0
          %403 = vmatpush1.msra.mxu0 0.0
          %404 = vmatprep.subr.mxu0 0.0
          %405 = vmatpush1.msra.mxu0 0.0
          %406 = vmatprep.subr.mxu0 0.0
          %407 = vmatpush1.msra.mxu0 0.0
          %408 = vmatprep.subr.mxu0 0.0
          %409 = vmatpush1.msra.mxu0 0.0
          %410 = vmatprep.subr.mxu0 0.0
          %411 = vmatpush1.msra.mxu0 0.0
          %412 = vmatprep.subr.mxu0 0.0
          %413 = vmatpush1.msra.mxu0 0.0
          %414 = vmatprep.subr.mxu0 0.0
          %415 = vmatpush1.msra.mxu0 0.0
          %416 = vmatprep.subr.mxu0 0.0
          %417 = vmatpush1.msra.mxu0 0.0
          %418 = vmatprep.subr.mxu0 0.0
          %419 = vmatpush1.msra.mxu0 0.0
          %420 = vmatprep.subr.mxu0 0.0
          %421 = vmatpush1.msra.mxu0 0.0
          %422 = vmatprep.subr.mxu0 0.0
          %423 = vmatpush1.msra.mxu0 0.0
          %424 = vmatprep.subr.mxu0 0.0
          %425 = vmatpush1.msra.mxu0 0.0
          %426 = vmatprep.subr.mxu0 0.0
          %427 = vmatpush1.msra.mxu0 0.0
          %428 = vmatprep.subr.mxu0 0.0
          %429 = vmatpush1.msra.mxu0 0.0
          %430 = vmatprep.subr.mxu0 0.0
          %431 = vmatpush1.msra.mxu0 0.0
          %432 = vmatprep.mubr.f32.mxu0 0.0
          %433 = vmatmul.mubr.f32.gmra.mrb[0].mxu0 %v366
          %v434 = vpop.f32.mrb[0].mxu0
          %v435 = vadd.f32 0.0, %v434
          %v436 = vpop.f32.mrb[0].mxu0
          %v437 = vadd.f32 0.0, %v436
          %438 = vdwg.mxu0
          %v441 = vcombine.low %v435, %v437
          %443 = vst [vmem:[#allocation2] sm:$0xff] %v441
          %v444 = vld [vmem:[%s2] sm:$0xf]
          %s445 = scalar_lea.vmem [#allocation4], 64
          %v446 = vld [vmem:[%s445] sm:$0xff]
          %v447 = vld [vmem:[%s445 + $0x8] sm:$0xff]
          %v448 = vld [vmem:[%s445 + $0x10] sm:$0xff]
          %v449 = vld [vmem:[%s445 + $0x18] sm:$0xff]
          %v450 = vld [vmem:[%s445 + $0x20] sm:$0xff]
          %v451 = vld [vmem:[%s445 + $0x28] sm:$0xff]
          %v452 = vld [vmem:[%s445 + $0x30] sm:$0xff]
          %v453 = vld [vmem:[%s445 + $0x38] sm:$0xff]
          %v455 = vsel %vm364, %v444, 0
          %457 = vmatprep.subr.mxu0 %v447
          %458 = vmatpush1.msra.mxu0 %v446
          %459 = vmatprep.subr.mxu0 %v449
          %460 = vmatpush1.msra.mxu0 %v448
          %461 = vmatprep.subr.mxu0 %v451
          %462 = vmatpush1.msra.mxu0 %v450
          %463 = vmatprep.subr.mxu0 %v453
          %464 = vmatpush1.msra.mxu0 %v452
          %465 = vmatprep.subr.mxu0 0.0
          %466 = vmatpush1.msra.mxu0 0.0
          %467 = vmatprep.subr.mxu0 0.0
          %468 = vmatpush1.msra.mxu0 0.0
          %469 = vmatprep.subr.mxu0 0.0
          %470 = vmatpush1.msra.mxu0 0.0
          %471 = vmatprep.subr.mxu0 0.0
          %472 = vmatpush1.msra.mxu0 0.0
          %473 = vmatprep.subr.mxu0 0.0
          %474 = vmatpush1.msra.mxu0 0.0
          %475 = vmatprep.subr.mxu0 0.0
          %476 = vmatpush1.msra.mxu0 0.0
          %477 = vmatprep.subr.mxu0 0.0
          %478 = vmatpush1.msra.mxu0 0.0
          %479 = vmatprep.subr.mxu0 0.0
          %480 = vmatpush1.msra.mxu0 0.0
          %481 = vmatprep.subr.mxu0 0.0
          %482 = vmatpush1.msra.mxu0 0.0
          %483 = vmatprep.subr.mxu0 0.0
          %484 = vmatpush1.msra.mxu0 0.0
          %485 = vmatprep.subr.mxu0 0.0
          %486 = vmatpush1.msra.mxu0 0.0
          %487 = vmatprep.subr.mxu0 0.0
          %488 = vmatpush1.msra.mxu0 0.0
          %489 = vmatprep.subr.mxu0 0.0
          %490 = vmatpush1.msra.mxu0 0.0
          %491 = vmatprep.subr.mxu0 0.0
          %492 = vmatpush1.msra.mxu0 0.0
          %493 = vmatprep.subr.mxu0 0.0
          %494 = vmatpush1.msra.mxu0 0.0
          %495 = vmatprep.subr.mxu0 0.0
          %496 = vmatpush1.msra.mxu0 0.0
          %497 = vmatprep.subr.mxu0 0.0
          %498 = vmatpush1.msra.mxu0 0.0
          %499 = vmatprep.subr.mxu0 0.0
          %500 = vmatpush1.msra.mxu0 0.0
          %501 = vmatprep.subr.mxu0 0.0
          %502 = vmatpush1.msra.mxu0 0.0
          %503 = vmatprep.subr.mxu0 0.0
          %504 = vmatpush1.msra.mxu0 0.0
          %505 = vmatprep.subr.mxu0 0.0
          %506 = vmatpush1.msra.mxu0 0.0
          %507 = vmatprep.subr.mxu0 0.0
          %508 = vmatpush1.msra.mxu0 0.0
          %509 = vmatprep.subr.mxu0 0.0
          %510 = vmatpush1.msra.mxu0 0.0
          %511 = vmatprep.subr.mxu0 0.0
          %512 = vmatpush1.msra.mxu0 0.0
          %513 = vmatprep.subr.mxu0 0.0
          %514 = vmatpush1.msra.mxu0 0.0
          %515 = vmatprep.subr.mxu0 0.0
          %516 = vmatpush1.msra.mxu0 0.0
          %517 = vmatprep.subr.mxu0 0.0
          %518 = vmatpush1.msra.mxu0 0.0
          %519 = vmatprep.subr.mxu0 0.0
          %520 = vmatpush1.msra.mxu0 0.0
          %521 = vmatprep.mubr.f32.mxu0 0.0
          %522 = vmatmul.mubr.f32.gmra.mrb[0].mxu0 %v455
          %v523 = vpop.f32.mrb[0].mxu0
          %v524 = vadd.f32 0.0, %v523
          %v525 = vpop.f32.mrb[0].mxu0
          %v526 = vadd.f32 0.0, %v525
          %527 = vdwg.mxu0
          %v530 = vcombine.low %v524, %v526
          %s532 = scalar_lea.vmem [#allocation2], 8
          %533 = vst [vmem:[%s532] sm:$0xff] %v530
          %v534 = vld [vmem:[#allocation2] sm:$0xff]
          %v535 = vld [vmem:[#allocation2 + $0x8] sm:$0xff]
          %v538 = vcombine.high %v534, %v534
          %v539 = vcombine.high %v535, %v535
          %vm542 = vcmask 1043456
          %v543 = vsel %vm542, %v534, 0.0
          %v544 = vsel %vm542, %v538, 0.0
          %v545 = vadd.f32 %v543, %v544
          %v546 = vsel %vm542, %v535, 0.0
          %v547 = vadd.f32 %v545, %v546
          %v548 = vsel %vm542, %v539, 0.0
          %v549 = vadd.f32 %v547, %v548
          %550 = vadd.xlane.f32.xlu0 %v549
          %v551 = vpop.xlane.xlu0 %550
          %v552 = vmul.f32 %v534, %v534
          %v553 = vmul.f32 %v535, %v535
          %v556 = vcombine.high %v552, %v552
          %v557 = vcombine.high %v553, %v553
          %v560 = vsel %vm542, %v552, 0.0
          %v561 = vsel %vm542, %v556, 0.0
          %v562 = vadd.f32 %v560, %v561
          %v563 = vsel %vm542, %v553, 0.0
          %v564 = vadd.f32 %v562, %v563
          %v565 = vsel %vm542, %v557, 0.0
          %v566 = vadd.f32 %v564, %v565
          %567 = vadd.xlane.f32.xlu0 %v566
          %v568 = vpop.xlane.xlu0 %567
          %v569 = vmul.f32 %v551, 0.001953125
          %v570 = vmul.f32 %v568, 0.001953125
          %v571 = vmul.f32 %v569, %v569
          %v572 = vsub.f32 %v570, %v571
          %v573 = vmax.f32 %v572, 0.0
          %v574 = vld [vmem:[%s3] sm:$0xf]
          %v575 = vadd.f32 %v573, 1e-05
          %v576 = vrsqrt.pop %v575
          %v577 = vmul.f32 %v574, %v576
          %v578 = vld [vmem:[%s4] sm:$0xf]
          %v579 = vmul.f32 %v577, %v569
          %v580 = vsub.f32 %v578, %v579
          %582 = vset.pattern.permute.xlu0 0
          %583 = vperm.xlu0 %582, %v577
          %v584 = vpop.permute.xlu0 %583
          %v586 = vunpack.c.l.s4 839922192
          %v587 = vunpack.c.0.s8 %v586
          %v588 = vlaneseq
          %v589 = vshrl.u32 %v588, 7
          %v590 = vsub.s32 %v587, %v589
          %v591 = vrot.slane %v584, %v590
          %v593 = vmul.f32 %v534, %v591
          %v594 = vmul.f32 %v535, %v591
          %596 = vset.pattern.permute.xlu0 0
          %597 = vperm.xlu0 %596, %v580
          %v598 = vpop.permute.xlu0 %597
          %v600 = vunpack.c.l.s4 839922192
          %v601 = vunpack.c.0.s8 %v600
          %v602 = vlaneseq
          %v603 = vshrl.u32 %v602, 7
          %v604 = vsub.s32 %v601, %v603
          %v605 = vrot.slane %v598, %v604
          %v607 = vadd.f32 %v593, %v605
          %v608 = vadd.f32 %v594, %v605
          %609 = vst [vmem:[#allocation2] sm:$0xff] %v607
          %610 = vst [vmem:[#allocation2 + $0x8] sm:$0xff] %v608
        $region64: #{tpu_custom_call.1} parent=51 // pred_fallthru
          _
        %s611 = smul.u32 %s28, 2
        %s612 = smul.addr %s611, 4
        %s613 = scalar_lea.vmem [#allocation2], %s612
        %v614 = vld [vmem:[%s613] sm:$0xff]
        %v615 = vld [vmem:[%s316] sm:$0xff]
        %v616 = vld [vmem:[%s316 + $0x8] sm:$0xff]
        %v617 = vld [vmem:[%s316 + $0x10] sm:$0xff]
        %v618 = vld [vmem:[%s316 + $0x18] sm:$0xff]
        %v619 = vld [vmem:[%s316 + $0x20] sm:$0xff]
        %v620 = vld [vmem:[%s316 + $0x28] sm:$0xff]
        %v621 = vld [vmem:[%s316 + $0x30] sm:$0xff]
        %v622 = vld [vmem:[%s316 + $0x38] sm:$0xff]
        %v623 = vld [vmem:[%s316 + $0x40] sm:$0xff]
        %v624 = vld [vmem:[%s316 + $0x48] sm:$0xff]
        %v625 = vld [vmem:[%s316 + $0x50] sm:$0xff]
        %v626 = vld [vmem:[%s316 + $0x58] sm:$0xff]
        %v627 = vld [vmem:[%s316 + $0x60] sm:$0xff]
        %v628 = vld [vmem:[%s316 + $0x68] sm:$0xff]
        %v629 = vld [vmem:[%s316 + $0x70] sm:$0xff]
        %v630 = vld [vmem:[%s316 + $0x78] sm:$0xff]
        %v631 = vld [vmem:[%s316 + $0x80] sm:$0xff]
        %v632 = vld [vmem:[%s316 + $0x88] sm:$0xff]
        %v633 = vld [vmem:[%s316 + $0x90] sm:$0xff]
        %v634 = vld [vmem:[%s316 + $0x98] sm:$0xff]
        %v635 = vld [vmem:[%s316 + $0xa0] sm:$0xff]
        %v636 = vld [vmem:[%s316 + $0xa8] sm:$0xff]
        %v637 = vld [vmem:[%s316 + $0xb0] sm:$0xff]
        %v638 = vld [vmem:[%s316 + $0xb8] sm:$0xff]
        %v639 = vld [vmem:[%s316 + $0xc0] sm:$0xff]
        %v640 = vld [vmem:[%s316 + $0xc8] sm:$0xff]
        %v641 = vld [vmem:[%s316 + $0xd0] sm:$0xff]
        %v642 = vld [vmem:[%s316 + $0xd8] sm:$0xff]
        %v643 = vld [vmem:[%s316 + $0xe0] sm:$0xff]
        %v644 = vld [vmem:[%s316 + $0xe8] sm:$0xff]
        %v645 = vld [vmem:[%s316 + $0xf0] sm:$0xff]
        %v646 = vld [vmem:[%s316 + $0xf8] sm:$0xff]
        %v648 = vcombine.high %v614, %v614
        %650 = vmatprep.subr.mxu0 %v616
        %651 = vmatpush1.xpose.msra.mxu0 %v615
        %652 = vmatprep.subr.mxu0 %v618
        %653 = vmatpush1.xpose.msra.mxu0 %v617
        %654 = vmatprep.subr.mxu0 %v620
        %655 = vmatpush1.xpose.msra.mxu0 %v619
        %656 = vmatprep.subr.mxu0 %v622
        %657 = vmatpush1.xpose.msra.mxu0 %v621
        %658 = vmatprep.subr.mxu0 %v624
        %659 = vmatpush1.xpose.msra.mxu0 %v623
        %660 = vmatprep.subr.mxu0 %v626
        %661 = vmatpush1.xpose.msra.mxu0 %v625
        %662 = vmatprep.subr.mxu0 %v628
        %663 = vmatpush1.xpose.msra.mxu0 %v627
        %664 = vmatprep.subr.mxu0 %v630
        %665 = vmatpush1.xpose.msra.mxu0 %v629
        %666 = vmatprep.subr.mxu0 %v632
        %667 = vmatpush1.xpose.msra.mxu0 %v631
        %668 = vmatprep.subr.mxu0 %v634
        %669 = vmatpush1.xpose.msra.mxu0 %v633
        %670 = vmatprep.subr.mxu0 %v636
        %671 = vmatpush1.xpose.msra.mxu0 %v635
        %672 = vmatprep.subr.mxu0 %v638
        %673 = vmatpush1.xpose.msra.mxu0 %v637
        %674 = vmatprep.subr.mxu0 %v640
        %675 = vmatpush1.xpose.msra.mxu0 %v639
        %676 = vmatprep.subr.mxu0 %v642
        %677 = vmatpush1.xpose.msra.mxu0 %v641
        %678 = vmatprep.subr.mxu0 %v644
        %679 = vmatpush1.xpose.msra.mxu0 %v643
        %680 = vmatprep.subr.mxu0 %v646
        %681 = vmatpush1.xpose.msra.mxu0 %v645
        %682 = vmatprep.subr.mxu0 0.0
        %683 = vmatpush1.xpose.msra.mxu0 0.0
        %684 = vmatprep.subr.mxu0 0.0
        %685 = vmatpush1.xpose.msra.mxu0 0.0
        %686 = vmatprep.subr.mxu0 0.0
        %687 = vmatpush1.xpose.msra.mxu0 0.0
        %688 = vmatprep.subr.mxu0 0.0
        %689 = vmatpush1.xpose.msra.mxu0 0.0
        %690 = vmatprep.subr.mxu0 0.0
        %691 = vmatpush1.xpose.msra.mxu0 0.0
        %692 = vmatprep.subr.mxu0 0.0
        %693 = vmatpush1.xpose.msra.mxu0 0.0
        %694 = vmatprep.subr.mxu0 0.0
        %695 = vmatpush1.xpose.msra.mxu0 0.0
        %696 = vmatprep.subr.mxu0 0.0
        %697 = vmatpush1.xpose.msra.mxu0 0.0
        %698 = vmatprep.subr.mxu0 0.0
        %699 = vmatpush1.xpose.msra.mxu0 0.0
        %700 = vmatprep.subr.mxu0 0.0
        %701 = vmatpush1.xpose.msra.mxu0 0.0
        %702 = vmatprep.subr.mxu0 0.0
        %703 = vmatpush1.xpose.msra.mxu0 0.0
        %704 = vmatprep.subr.mxu0 0.0
        %705 = vmatpush1.xpose.msra.mxu0 0.0
        %706 = vmatprep.subr.mxu0 0.0
        %707 = vmatpush1.xpose.msra.mxu0 0.0
        %708 = vmatprep.subr.mxu0 0.0
        %709 = vmatpush1.xpose.msra.mxu0 0.0
        %710 = vmatprep.subr.mxu0 0.0
        %711 = vmatpush1.xpose.msra.mxu0 0.0
        %712 = vmatprep.subr.mxu0 0.0
        %713 = vmatpush1.xpose.msra.mxu0 0.0
        %714 = vmatprep.mubr.f32.mxu0 %v648
        %715 = vmatmul.mubr.f32.gmra.mrb[0].mxu0 %v614
        %v716 = vpop.f32.mrb[0].mxu0
        %v717 = vadd.f32 0.0, %v716
        %v718 = vpop.f32.mrb[0].mxu0
        %719 = vdwg.mxu0
        %v720 = vld [vmem:[%s5] sm:$0xff]
        %v721 = vld [vmem:[%s5 + $0x8] sm:$0xff]
        %v722 = vld [vmem:[%s5 + $0x10] sm:$0xff]
        %v723 = vld [vmem:[%s5 + $0x18] sm:$0xff]
        %vm724 = vcmask 31744
        %v726 = vsel %vm724, %v720, 0
        %v729 = vsel %vm724, %v721, 0
        %v732 = vsel %vm724, %v722, 0
        %v735 = vsel %vm724, %v723, 0
        %vm737 = vcmask 1043456
        %v739 = vsel %vm737, %v717, 0
        %741 = vmatprep.subr.mxu0 0.0
        %742 = vmatpush1.msra.mxu0 %v739
        %743 = vmatprep.subr.mxu0 0.0
        %744 = vmatpush1.msra.mxu0 0.0
        %745 = vmatprep.subr.mxu0 0.0
        %746 = vmatpush1.msra.mxu0 0.0
        %747 = vmatprep.subr.mxu0 0.0
        %748 = vmatpush1.msra.mxu0 0.0
        %749 = vmatprep.subr.mxu0 0.0
        %750 = vmatpush1.msra.mxu0 0.0
        %751 = vmatprep.subr.mxu0 0.0
        %752 = vmatpush1.msra.mxu0 0.0
        %753 = vmatprep.subr.mxu0 0.0
        %754 = vmatpush1.msra.mxu0 0.0
        %755 = vmatprep.subr.mxu0 0.0
        %756 = vmatpush1.msra.mxu0 0.0
        %757 = vmatprep.subr.mxu0 0.0
        %758 = vmatpush1.msra.mxu0 0.0
        %759 = vmatprep.subr.mxu0 0.0
        %760 = vmatpush1.msra.mxu0 0.0
        %761 = vmatprep.subr.mxu0 0.0
        %762 = vmatpush1.msra.mxu0 0.0
        %763 = vmatprep.subr.mxu0 0.0
        %764 = vmatpush1.msra.mxu0 0.0
        %765 = vmatprep.subr.mxu0 0.0
        %766 = vmatpush1.msra.mxu0 0.0
        %767 = vmatprep.subr.mxu0 0.0
        %768 = vmatpush1.msra.mxu0 0.0
        %769 = vmatprep.subr.mxu0 0.0
        %770 = vmatpush1.msra.mxu0 0.0
        %771 = vmatprep.subr.mxu0 0.0
        %772 = vmatpush1.msra.mxu0 0.0
        %773 = vmatprep.subr.mxu0 0.0
        %774 = vmatpush1.msra.mxu0 0.0
        %775 = vmatprep.subr.mxu0 0.0
        %776 = vmatpush1.msra.mxu0 0.0
        %777 = vmatprep.subr.mxu0 0.0
        %778 = vmatpush1.msra.mxu0 0.0
        %779 = vmatprep.subr.mxu0 0.0
        %780 = vmatpush1.msra.mxu0 0.0
        %781 = vmatprep.subr.mxu0 0.0
        %782 = vmatpush1.msra.mxu0 0.0
        %783 = vmatprep.subr.mxu0 0.0
        %784 = vmatpush1.msra.mxu0 0.0
        %785 = vmatprep.subr.mxu0 0.0
        %786 = vmatpush1.msra.mxu0 0.0
        %787 = vmatprep.subr.mxu0 0.0
        %788 = vmatpush1.msra.mxu0 0.0
        %789 = vmatprep.subr.mxu0 0.0
        %790 = vmatpush1.msra.mxu0 0.0
        %791 = vmatprep.subr.mxu0 0.0
        %792 = vmatpush1.msra.mxu0 0.0
        %793 = vmatprep.subr.mxu0 0.0
        %794 = vmatpush1.msra.mxu0 0.0
        %795 = vmatprep.subr.mxu0 0.0
        %796 = vmatpush1.msra.mxu0 0.0
        %797 = vmatprep.subr.mxu0 0.0
        %798 = vmatpush1.msra.mxu0 0.0
        %799 = vmatprep.subr.mxu0 0.0
        %800 = vmatpush1.msra.mxu0 0.0
        %801 = vmatprep.subr.mxu0 0.0
        %802 = vmatpush1.msra.mxu0 0.0
        %803 = vmatprep.subr.mxu0 0.0
        %804 = vmatpush1.msra.mxu0 0.0
        %805 = vmatprep.mubr.f32.mxu0 0.0
        %806 = vmatmul.mubr.f32.gmra.mrb[0].mxu0 %v726
        %v807 = vpop.f32.mrb[0].mxu0
        %v808 = vadd.f32 0.0, %v807
        %v809 = vpop.f32.mrb[0].mxu0
        %810 = vmatprep.mubr.f32.mxu0 0.0
        %811 = vmatmul.mubr.f32.gmra.mrb[0].mxu0 %v729
        %v812 = vpop.f32.mrb[0].mxu0
        %v813 = vadd.f32 0.0, %v812
        %v814 = vpop.f32.mrb[0].mxu0
        %815 = vmatprep.mubr.f32.mxu0 0.0
        %816 = vmatmul.mubr.f32.gmra.mrb[0].mxu0 %v732
        %v817 = vpop.f32.mrb[0].mxu0
        %v818 = vadd.f32 0.0, %v817
        %v819 = vpop.f32.mrb[0].mxu0
        %820 = vmatprep.mubr.f32.mxu0 0.0
        %821 = vmatmul.mubr.f32.gmra.mrb[0].mxu0 %v735
        %v822 = vpop.f32.mrb[0].mxu0
        %v823 = vadd.f32 0.0, %v822
        %v824 = vpop.f32.mrb[0].mxu0
        %825 = vdwg.mxu0
        %s826 = smul.u32 %s29, 128
        %s827 = sshra.s32 %s826, 7
        %s828 = sand.u32 %s826, 127
        %s829 = smul.u32 %s28, 8
        %s830 = sadd.s32 %s827, %s829
        %s831 = smul.addr %s830, 8
        %s832 = scalar_lea.vmem [#allocation3], %s831
        %833 = vst [vmem:[%s832] sm:$0xff] %v808
        %834 = vst [vmem:[%s832 + $0x10] sm:$0xff] %v813
        %835 = vst [vmem:[%s832 + $0x20] sm:$0xff] %v818
        %836 = vst [vmem:[%s832 + $0x30] sm:$0xff] %v823
        // Predicated region
        $region65: #{tpu_custom_call.1} parent=51 // pred_check
          _
        $region66: #{tpu_custom_call.1} parent=51 // pred_check_branch
          %838 = sbr.rel (%p351) target = $region68
        $region67: #{tpu_custom_call.1} parent=51 // pred_region
          %v839 = vld [vmem:[#allocation3] sm:$0xff]
          %v840 = vld [vmem:[#allocation3 + $0x8] sm:$0xff]
          %v841 = vld [vmem:[#allocation3 + $0x10] sm:$0xff]
          %v842 = vld [vmem:[#allocation3 + $0x18] sm:$0xff]
          %v843 = vld [vmem:[#allocation3 + $0x20] sm:$0xff]
          %v844 = vld [vmem:[#allocation3 + $0x28] sm:$0xff]
          %v845 = vld [vmem:[#allocation3 + $0x30] sm:$0xff]
          %v846 = vld [vmem:[#allocation3 + $0x38] sm:$0xff]
          %v847 = vld [vmem:[#allocation3 + $0x40] sm:$0xff]
          %v848 = vld [vmem:[#allocation3 + $0x48] sm:$0xff]
          %v849 = vld [vmem:[#allocation3 + $0x50] sm:$0xff]
          %v850 = vld [vmem:[#allocation3 + $0x58] sm:$0xff]
          %v851 = vld [vmem:[#allocation3 + $0x60] sm:$0xff]
          %v852 = vld [vmem:[#allocation3 + $0x68] sm:$0xff]
          %v853 = vld [vmem:[#allocation3 + $0x70] sm:$0xff]
          %v854 = vld [vmem:[#allocation3 + $0x78] sm:$0xff]
          %v855 = vadd.f32 %v839, %v840
          %v856 = vadd.f32 %v855, %v847
          %v857 = vadd.f32 %v856, %v848
          %858 = vadd.xlane.f32.xlu0 %v857
          %v859 = vpop.xlane.xlu0 %858
          %v860 = vadd.f32 %v841, %v842
          %v861 = vadd.f32 %v860, %v849
          %v862 = vadd.f32 %v861, %v850
          %863 = vadd.xlane.f32.xlu0 %v862
          %v864 = vpop.xlane.xlu0 %863
          %v865 = vadd.f32 %v843, %v844
          %v866 = vadd.f32 %v865, %v851
          %v867 = vadd.f32 %v866, %v852
          %868 = vadd.xlane.f32.xlu0 %v867
          %v869 = vpop.xlane.xlu0 %868
          %v870 = vadd.f32 %v845, %v846
          %v871 = vadd.f32 %v870, %v853
          %v872 = vadd.f32 %v871, %v854
          %873 = vadd.xlane.f32.xlu0 %v872
          %v874 = vpop.xlane.xlu0 %873
          %v875 = vmul.f32 %v839, %v839
          %v876 = vmul.f32 %v840, %v840
          %v877 = vmul.f32 %v841, %v841
          %v878 = vmul.f32 %v842, %v842
          %v879 = vmul.f32 %v843, %v843
          %v880 = vmul.f32 %v844, %v844
          %v881 = vmul.f32 %v845, %v845
          %v882 = vmul.f32 %v846, %v846
          %v883 = vmul.f32 %v847, %v847
          %v884 = vmul.f32 %v848, %v848
          %v885 = vmul.f32 %v849, %v849
          %v886 = vmul.f32 %v850, %v850
          %v887 = vmul.f32 %v851, %v851
          %v888 = vmul.f32 %v852, %v852
          %v889 = vmul.f32 %v853, %v853
          %v890 = vmul.f32 %v854, %v854
          %v891 = vadd.f32 %v875, %v876
          %v892 = vadd.f32 %v891, %v883
          %v893 = vadd.f32 %v892, %v884
          %894 = vadd.xlane.f32.xlu0 %v893
          %v895 = vpop.xlane.xlu0 %894
          %v896 = vadd.f32 %v877, %v878
          %v897 = vadd.f32 %v896, %v885
          %v898 = vadd.f32 %v897, %v886
          %899 = vadd.xlane.f32.xlu0 %v898
          %v900 = vpop.xlane.xlu0 %899
          %v901 = vadd.f32 %v879, %v880
          %v902 = vadd.f32 %v901, %v887
          %v903 = vadd.f32 %v902, %v888
          %904 = vadd.xlane.f32.xlu0 %v903
          %v905 = vpop.xlane.xlu0 %904
          %v906 = vadd.f32 %v881, %v882
          %v907 = vadd.f32 %v906, %v889
          %v908 = vadd.f32 %v907, %v890
          %909 = vadd.xlane.f32.xlu0 %v908
          %v910 = vpop.xlane.xlu0 %909
          %v911 = vmul.f32 %v859, 0.001953125
          %v912 = vmul.f32 %v864, 0.001953125
          %v913 = vmul.f32 %v869, 0.001953125
          %v914 = vmul.f32 %v874, 0.001953125
          %v915 = vmul.f32 %v895, 0.001953125
          %v916 = vmul.f32 %v900, 0.001953125
          %v917 = vmul.f32 %v905, 0.001953125
          %v918 = vmul.f32 %v910, 0.001953125
          %v919 = vmul.f32 %v911, %v911
          %v920 = vmul.f32 %v912, %v912
          %v921 = vmul.f32 %v913, %v913
          %v922 = vmul.f32 %v914, %v914
          %v923 = vsub.f32 %v915, %v919
          %v924 = vsub.f32 %v916, %v920
          %v925 = vsub.f32 %v917, %v921
          %v926 = vsub.f32 %v918, %v922
          %v927 = vmax.f32 %v923, 0.0
          %v928 = vmax.f32 %v924, 0.0
          %v929 = vmax.f32 %v925, 0.0
          %v930 = vmax.f32 %v926, 0.0
          %v931 = vld [vmem:[%s6] sm:$0xff]
          %v932 = vld [vmem:[%s6 + $0x8] sm:$0xff]
          %v933 = vld [vmem:[%s6 + $0x10] sm:$0xff]
          %v934 = vld [vmem:[%s6 + $0x18] sm:$0xff]
          %v935 = vadd.f32 %v927, 1e-05
          %v936 = vadd.f32 %v928, 1e-05
          %v937 = vadd.f32 %v929, 1e-05
          %v938 = vadd.f32 %v930, 1e-05
          %v939 = vrsqrt.pop %v935
          %v940 = vrsqrt.pop %v936
          %v941 = vrsqrt.pop %v937
          %v942 = vrsqrt.pop %v938
          %v943 = vmul.f32 %v931, %v939
          %v944 = vmul.f32 %v932, %v940
          %v945 = vmul.f32 %v933, %v941
          %v946 = vmul.f32 %v934, %v942
          %v947 = vld [vmem:[%s7] sm:$0xff]
          %v948 = vld [vmem:[%s7 + $0x8] sm:$0xff]
          %v949 = vld [vmem:[%s7 + $0x10] sm:$0xff]
          %v950 = vld [vmem:[%s7 + $0x18] sm:$0xff]
          %v951 = vmul.f32 %v943, %v911
          %v952 = vmul.f32 %v944, %v912
          %v953 = vmul.f32 %v945, %v913
          %v954 = vmul.f32 %v946, %v914
          %v955 = vsub.f32 %v947, %v951
          %v956 = vsub.f32 %v948, %v952
          %v957 = vsub.f32 %v949, %v953
          %v958 = vsub.f32 %v950, %v954
          %960 = vset.pattern.permute.xlu0 0
          %961 = vperm.xlu0 %960, %v943
          %v962 = vpop.permute.xlu0 %961
          %965 = vset.pattern.permute.xlu0 0
          %966 = vperm.xlu0 %965, %v944
          %v967 = vpop.permute.xlu0 %966
          %970 = vset.pattern.permute.xlu0 0
          %971 = vperm.xlu0 %970, %v945
          %v972 = vpop.permute.xlu0 %971
          %975 = vset.pattern.permute.xlu0 0
          %976 = vperm.xlu0 %975, %v946
          %v977 = vpop.permute.xlu0 %976
          %v979 = vmul.f32 %v839, %v962
          %v980 = vmul.f32 %v840, %v962
          %v981 = vmul.f32 %v841, %v967
          %v982 = vmul.f32 %v842, %v967
          %v983 = vmul.f32 %v843, %v972
          %v984 = vmul.f32 %v844, %v972
          %v985 = vmul.f32 %v845, %v977
          %v986 = vmul.f32 %v846, %v977
          %v987 = vmul.f32 %v847, %v962
          %v988 = vmul.f32 %v848, %v962
          %v989 = vmul.f32 %v849, %v967
          %v990 = vmul.f32 %v850, %v967
          %v991 = vmul.f32 %v851, %v972
          %v992 = vmul.f32 %v852, %v972
          %v993 = vmul.f32 %v853, %v977
          %v994 = vmul.f32 %v854, %v977
          %996 = vset.pattern.permute.xlu0 0
          %997 = vperm.xlu0 %996, %v955
          %v998 = vpop.permute.xlu0 %997
          %1001 = vset.pattern.permute.xlu0 0
          %1002 = vperm.xlu0 %1001, %v956
          %v1003 = vpop.permute.xlu0 %1002
          %1006 = vset.pattern.permute.xlu0 0
          %1007 = vperm.xlu0 %1006, %v957
          %v1008 = vpop.permute.xlu0 %1007
          %1011 = vset.pattern.permute.xlu0 0
          %1012 = vperm.xlu0 %1011, %v958
          %v1013 = vpop.permute.xlu0 %1012
          %v1015 = vadd.f32 %v979, %v998
          %v1016 = vadd.f32 %v980, %v998
          %v1017 = vadd.f32 %v981, %v1003
          %v1018 = vadd.f32 %v982, %v1003
          %v1019 = vadd.f32 %v983, %v1008
          %v1020 = vadd.f32 %v984, %v1008
          %v1021 = vadd.f32 %v985, %v1013
          %v1022 = vadd.f32 %v986, %v1013
          %v1023 = vadd.f32 %v987, %v998
          %v1024 = vadd.f32 %v988, %v998
          %v1025 = vadd.f32 %v989, %v1003
          %v1026 = vadd.f32 %v990, %v1003
          %v1027 = vadd.f32 %v991, %v1008
          %v1028 = vadd.f32 %v992, %v1008
          %v1029 = vadd.f32 %v993, %v1013
          %v1030 = vadd.f32 %v994, %v1013
          %v1031 = vld [vmem:[#allocation4] sm:$0xff]
          %v1032 = vld [vmem:[#allocation4 + $0x8] sm:$0xff]
          %v1033 = vld [vmem:[#allocation4 + $0x10] sm:$0xff]
          %v1034 = vld [vmem:[#allocation4 + $0x18] sm:$0xff]
          %v1035 = vld [vmem:[#allocation4 + $0x20] sm:$0xff]
          %v1036 = vld [vmem:[#allocation4 + $0x28] sm:$0xff]
          %v1037 = vld [vmem:[#allocation4 + $0x30] sm:$0xff]
          %v1038 = vld [vmem:[#allocation4 + $0x38] sm:$0xff]
          %v1039 = vld [vmem:[#allocation4 + $0x40] sm:$0xff]
          %v1040 = vld [vmem:[#allocation4 + $0x48] sm:$0xff]
          %v1041 = vld [vmem:[#allocation4 + $0x50] sm:$0xff]
          %v1042 = vld [vmem:[#allocation4 + $0x58] sm:$0xff]
          %v1043 = vld [vmem:[#allocation4 + $0x60] sm:$0xff]
          %v1044 = vld [vmem:[#allocation4 + $0x68] sm:$0xff]
          %v1045 = vld [vmem:[#allocation4 + $0x70] sm:$0xff]
          %v1046 = vld [vmem:[#allocation4 + $0x78] sm:$0xff]
          %v1047 = vadd.f32 %v1015, %v1031
          %v1048 = vadd.f32 %v1016, %v1032
          %v1049 = vadd.f32 %v1017, %v1033
          %v1050 = vadd.f32 %v1018, %v1034
          %v1051 = vadd.f32 %v1019, %v1035
          %v1052 = vadd.f32 %v1020, %v1036
          %v1053 = vadd.f32 %v1021, %v1037
          %v1054 = vadd.f32 %v1022, %v1038
          %v1055 = vadd.f32 %v1023, %v1039
          %v1056 = vadd.f32 %v1024, %v1040
          %v1057 = vadd.f32 %v1025, %v1041
          %v1058 = vadd.f32 %v1026, %v1042
          %v1059 = vadd.f32 %v1027, %v1043
          %v1060 = vadd.f32 %v1028, %v1044
          %v1061 = vadd.f32 %v1029, %v1045
          %v1062 = vadd.f32 %v1030, %v1046
          %1063 = vst [vmem:[#allocation9] sm:$0xff] %v1047
          %1064 = vst [vmem:[#allocation9 + $0x8] sm:$0xff] %v1048
          %1065 = vst [vmem:[#allocation9 + $0x10] sm:$0xff] %v1049
          %1066 = vst [vmem:[#allocation9 + $0x18] sm:$0xff] %v1050
          %1067 = vst [vmem:[#allocation9 + $0x20] sm:$0xff] %v1051
          %1068 = vst [vmem:[#allocation9 + $0x28] sm:$0xff] %v1052
          %1069 = vst [vmem:[#allocation9 + $0x30] sm:$0xff] %v1053
          %1070 = vst [vmem:[#allocation9 + $0x38] sm:$0xff] %v1054
          %1071 = vst [vmem:[#allocation9 + $0x40] sm:$0xff] %v1055
          %1072 = vst [vmem:[#allocation9 + $0x48] sm:$0xff] %v1056
          %1073 = vst [vmem:[#allocation9 + $0x50] sm:$0xff] %v1057
          %1074 = vst [vmem:[#allocation9 + $0x58] sm:$0xff] %v1058
          %1075 = vst [vmem:[#allocation9 + $0x60] sm:$0xff] %v1059
          %1076 = vst [vmem:[#allocation9 + $0x68] sm:$0xff] %v1060
          %1077 = vst [vmem:[#allocation9 + $0x70] sm:$0xff] %v1061
          %1078 = vst [vmem:[#allocation9 + $0x78] sm:$0xff] %v1062
        $region68: #{tpu_custom_call.1} parent=51 // pred_fallthru
          _
        // Predicated region
        $region69: #{tpu_custom_call.1} parent=51 // pred_check
          %p1079 = pneg %p224
        $region70: #{tpu_custom_call.1} parent=51 // pred_check_branch
          %1081 = sbr.rel (%p1079) target = $region72
        $region71: #{tpu_custom_call.1} parent=51 // pred_region
          %s1083 = ssub.s32 2048, 2048
          %1084 = vsyncadd [#allocation6], %s1083
          %s1085 = sshll.u32 [#allocation9], 4
          %s1086 = int_to_ptr.vmem [resolvable:$true] %s1085
          %1091 = dma.vmem_to_hbm [thread:$0]  %s1086, 2048, %s8, [#allocation6], 256, 256, 16
        $region72: #{tpu_custom_call.1} parent=51 // pred_fallthru
          _
        // Predicated region
        $region73: #{tpu_custom_call.1} parent=51 // pred_check
          %p1092 = pneg %p224
        $region74: #{tpu_custom_call.1} parent=51 // pred_check_branch
          %1094 = sbr.rel (%p1092) target = $region76
        $region75: #{tpu_custom_call.1} parent=51 // pred_region
          %1095 = dma.done [#allocation6], 2048
        $region76: #{tpu_custom_call.1} parent=51 // pred_fallthru
          _
      $region52: #{tpu_custom_call.1} parent=5 // pred_fallthru
        _
      %p1096 = scmp.le.s32.totalorder 2, %s19
      // Predicated region
      $region77: #{tpu_custom_call.1} parent=5 // pred_check
        %p1097 = pneg %p1096
      $region78: #{tpu_custom_call.1} parent=5 // pred_check_branch
        %1099 = sbr.rel (%p1097) target = $region80
      $region79: #{tpu_custom_call.1} parent=5 // pred_region
        %s1100 = ssub.s32 %s19, 2
      $region80: #{tpu_custom_call.1} parent=5 // pred_fallthru
        _
    $region6: #{tpu_custom_call.1} parent=1 // loop_footer
      %s23 = sadd.s32 1, %s19
    $region7: #{tpu_custom_call.1} parent=1 // loop_footer_branch
      %18 = sbr.rel target = $region3
    $region8: #{tpu_custom_call.1} parent=1 // loop_exit
      _
    %1101 = vsyncpa [#allocation5], 1
    %s1102 = scalar_lea.sflag [#allocation5], 1
    %1103 = vsyncpa %s1102, 1
    %1104 = vsyncpa [#allocation8], 1
    %s1105 = scalar_lea.sflag [#allocation8], 1
    %1106 = vsyncpa %s1105, 1
    %1107 = vsyncpa [#allocation6], 1
    %s1108 = scalar_lea.sflag [#allocation6], 1
    %1109 = vsyncpa %s1108, 1

</llo_original>
